<compile_context>
chip_gen: v5e
topology: v5e:2x2
jax: 0.10.0
libtpu: 0.0.40
codegen_flags: <defaults>
</compile_context>

<pallas_src>
import functools
import math

import jax
import jax.numpy as jnp
from jax.experimental import pallas as pl
from jax.experimental.pallas import tpu as pltpu

_VMEM = pl.BlockSpec(memory_space=pltpu.MemorySpace.VMEM)
_INV_SQRT2 = 1.0 / math.sqrt(2.0)
_MASK_SCALE = -10000.0          # HF-BERT additive mask convention
_LN_EPS = 1e-12


# ----------------------------- in-kernel helpers ------------------------------

def _gelu_exact(x):
    # exact (erf) gelu, as in BERT; multiply by precomputed 1/sqrt(2) (no divide)
    return 0.5 * x * (1.0 + jax.lax.erf(x * jnp.float32(_INV_SQRT2)))


def _layernorm(x, g, b, eps=_LN_EPS):
    mean = jnp.mean(x, axis=-1, keepdims=True)
    var = jnp.mean(jnp.square(x - mean), axis=-1, keepdims=True)
    return (x - mean) * jax.lax.rsqrt(var + eps) * g + b


# ----------------------------- Pallas kernels ---------------------------------

def _emb_ln_kernel(x_ref, g_ref, b_ref, o_ref):
    # LayerNorm over the embedding sum; no residual placeholder is DMA'd.
    x = x_ref[...].astype(jnp.float32)
    o_ref[...] = _layernorm(x, g_ref[...], b_ref[...]).astype(o_ref.dtype)


def embed_layernorm(x2d, gamma, beta):
    return pl.pallas_call(
        _emb_ln_kernel,
        out_shape=jax.ShapeDtypeStruct(x2d.shape, jnp.float32),
        in_specs=[_VMEM, _VMEM, _VMEM],
        out_specs=_VMEM,
    )(x2d, gamma, beta)


def _attn_block_kernel(x_ref, mask_ref, wqkv_ref, bqkv_ref, wo_ref, bo_ref,
                       g_ref, b_ref, o_ref, *, num_heads, head_dim, scale):
    """Fused: QKV proj -> per-head softmax attention -> out proj -> +residual -> LayerNorm.

    Block shapes (one batch element per grid step):
      x: [1, S, H]   mask: [1, 1, S]   weights: full arrays (bf16)   out: [1, S, H]
    """
    x = x_ref[0].astype(jnp.float32)                          # [S, H] residual (f32)
    S, H = x.shape

    # QKV projection — one MXU call with N = 3H.
    qkv = jnp.dot(x.astype(jnp.bfloat16), wqkv_ref[...],
                  preferred_element_type=jnp.float32) + bqkv_ref[...]   # [S, 3H] f32

    # additive mask, broadcast per head in-vreg (never materialized per head in HBM)
    add_mask = (1.0 - mask_ref[0].astype(jnp.float32)) * _MASK_SCALE    # [1, S]

    # Per-head attention with in-kernel lane slices; head outputs are folded directly
    # into the output projection (ctx_h @ wo[rows of head h]) — no concat, no transpose.
    attn = jnp.zeros((S, H), jnp.float32)
    for h in range(num_heads):
        q = qkv[:, h * head_dim:(h + 1) * head_dim].astype(jnp.bfloat16)          # [S, Dh]
        k = qkv[:, H + h * head_dim:H + (h + 1) * head_dim].astype(jnp.bfloat16)  # [S, Dh]
        v = qkv[:, 2 * H + h * head_dim:2 * H + (h + 1) * head_dim].astype(jnp.bfloat16)

        s = jax.lax.dot_general(q, k, (((1,), (1,)), ((), ())),
                                preferred_element_type=jnp.float32)    # [S, S]
        s = s * scale + add_mask
        s = s - jnp.max(s, axis=-1, keepdims=True)
        p = jnp.exp(s)
        p = p * pl.reciprocal(jnp.sum(p, axis=-1, keepdims=True), approx=True)

        ctx = jnp.dot(p.astype(jnp.bfloat16), v,
                      preferred_element_type=jnp.float32)              # [S, Dh]
        attn += jnp.dot(ctx.astype(jnp.bfloat16),
                        wo_ref[h * head_dim:(h + 1) * head_dim, :],
                        preferred_element_type=jnp.float32)            # [S, H]

    attn = attn + bo_ref[...]
    o_ref[0] = _layernorm(attn + x, g_ref[...], b_ref[...]).astype(o_ref.dtype)


def attention_block(x, mask, wqkv, bqkv, wo, bo, gamma, beta, *, num_heads):
    B, S, H = x.shape
    head_dim = H // num_heads
    kernel = functools.partial(_attn_block_kernel, num_heads=num_heads,
                               head_dim=head_dim, scale=1.0 / math.sqrt(head_dim))
    return pl.pallas_call(
        kernel,
        out_shape=jax.ShapeDtypeStruct((B, S, H), jnp.float32),
        grid=(B,),
        in_specs=[
            pl.BlockSpec((1, S, H), lambda b: (b, 0, 0)),      # x (one batch element)
            pl.BlockSpec((1, 1, S), lambda b: (b, 0, 0)),      # mask [B,1,S]
            pl.BlockSpec((H, 3 * H), lambda b: (0, 0)),        # wqkv (resident; index unchanged)
            pl.BlockSpec((1, 3 * H), lambda b: (0, 0)),
            pl.BlockSpec((H, H), lambda b: (0, 0)),
            pl.BlockSpec((1, H), lambda b: (0, 0)),
            pl.BlockSpec((1, H), lambda b: (0, 0)),
            pl.BlockSpec((1, H), lambda b: (0, 0)),
        ],
        out_specs=pl.BlockSpec((1, S, H), lambda b: (b, 0, 0)),
        compiler_params=pltpu.CompilerParams(
            dimension_semantics=("parallel",)),                # megacore on v7x
    )(x, mask, wqkv, bqkv, wo, bo, gamma, beta)


def _ffn_block_kernel(x_ref, wi_ref, bi_ref, wf_ref, bf_ref, g_ref, b_ref, o_ref):
    """Fused: FFN-up + gelu + FFN-down + residual + LayerNorm."""
    x = x_ref[0].astype(jnp.float32)                                   # [S, H]
    h = jnp.dot(x.astype(jnp.bfloat16), wi_ref[...],
                preferred_element_type=jnp.float32) + bi_ref[...]      # [S, I]
    h = _gelu_exact(h)
    y = jnp.dot(h.astype(jnp.bfloat16), wf_ref[...],
                preferred_element_type=jnp.float32) + bf_ref[...]      # [S, H]
    o_ref[0] = _layernorm(y + x, g_ref[...], b_ref[...]).astype(o_ref.dtype)


def ffn_block(x, wi, bi, wf, bf_, gamma, beta):
    B, S, H = x.shape
    I = wi.shape[1]
    return pl.pallas_call(
        _ffn_block_kernel,
        out_shape=jax.ShapeDtypeStruct((B, S, H), jnp.float32),
        grid=(B,),
        in_specs=[
            pl.BlockSpec((1, S, H), lambda b: (b, 0, 0)),
            pl.BlockSpec((H, I), lambda b: (0, 0)),
            pl.BlockSpec((1, I), lambda b: (0, 0)),
            pl.BlockSpec((I, H), lambda b: (0, 0)),
            pl.BlockSpec((1, H), lambda b: (0, 0)),
            pl.BlockSpec((1, H), lambda b: (0, 0)),
            pl.BlockSpec((1, H), lambda b: (0, 0)),
        ],
        out_specs=pl.BlockSpec((1, S, H), lambda b: (b, 0, 0)),
        compiler_params=pltpu.CompilerParams(
            dimension_semantics=("parallel",)),
    )(x, wi, bi, wf, bf_, gamma, beta)


def _pool_cls_kernel(cls_ref, pw_ref, pb_ref, cw_ref, cb_ref, o_ref):
    """Fused pooler (CLS Linear + tanh) + classifier, lane-dense padded output."""
    cls = cls_ref[...].astype(jnp.float32)                             # [B, H]
    pooled = jnp.tanh(jnp.dot(cls.astype(jnp.bfloat16), pw_ref[...],
                              preferred_element_type=jnp.float32) + pb_ref[...])
    logits = jnp.dot(pooled.astype(jnp.bfloat16), cw_ref[...],
                     preferred_element_type=jnp.float32) + cb_ref[...]  # [B, 128]
    o_ref[...] = logits.astype(o_ref.dtype)


def pool_classify(cls, pool_w, pool_b, cls_w_pad, cls_b_pad):
    B = cls.shape[0]
    n_pad = cls_w_pad.shape[1]
    return pl.pallas_call(
        _pool_cls_kernel,
        out_shape=jax.ShapeDtypeStruct((B, n_pad), jnp.float32),
        in_specs=[_VMEM, _VMEM, _VMEM, _VMEM, _VMEM],
        out_specs=_VMEM,
    )(cls, pool_w, pool_b, cls_w_pad, cls_b_pad)


# ----------------------------- model wrapper -----------------------------------

def init_params(key, *, vocab=99, hidden=32, num_layers=2, num_heads=2,
                inter=64, max_pos=16, type_vocab=2, num_classes=13):
    keys = iter(jax.random.split(key, 64))

    def nrm(shape):
        return jax.random.normal(next(keys), shape, jnp.float32) * 0.02

    # classifier weight/bias padded to a lane-dense 128-wide output
    n_pad = 128
    cls_w = nrm((hidden, num_classes))
    cls_w_pad = jnp.zeros((hidden, n_pad), jnp.float32).at[:, :num_classes].set(cls_w)
    cls_b_pad = jnp.zeros((1, n_pad), jnp.float32)

    params = dict(
        num_heads=num_heads,
        num_classes=num_classes,
        word_emb=nrm((vocab, hidden)),
        pos_emb=nrm((max_pos, hidden)),
        type_emb=nrm((type_vocab, hidden)),
        emb_ln_g=jnp.ones((1, hidden), jnp.float32),
        emb_ln_b=jnp.zeros((1, hidden), jnp.float32),
        layers=[],
        pool_w=nrm((hidden, hidden)).astype(jnp.bfloat16),
        pool_b=jnp.zeros((1, hidden), jnp.float32),
        cls_w_pad=cls_w_pad.astype(jnp.bfloat16),
        cls_b_pad=cls_b_pad,
    )
    for _ in range(num_layers):
        wq, wk, wv = nrm((hidden, hidden)), nrm((hidden, hidden)), nrm((hidden, hidden))
        params["layers"].append(dict(
            # fused QKV weight (H, 3H) in bf16, fused bias (1, 3H) in f32
            wqkv=jnp.concatenate([wq, wk, wv], axis=1).astype(jnp.bfloat16),
            bqkv=jnp.zeros((1, 3 * hidden), jnp.float32),
            wo=nrm((hidden, hidden)).astype(jnp.bfloat16),
            bo=jnp.zeros((1, hidden), jnp.float32),
            ln1_g=jnp.ones((1, hidden), jnp.float32),
            ln1_b=jnp.zeros((1, hidden), jnp.float32),
            wi=nrm((hidden, inter)).astype(jnp.bfloat16),
            bi=jnp.zeros((1, inter), jnp.float32),
            wf=nrm((inter, hidden)).astype(jnp.bfloat16),
            bf=jnp.zeros((1, hidden), jnp.float32),
            ln2_g=jnp.ones((1, hidden), jnp.float32),
            ln2_b=jnp.zeros((1, hidden), jnp.float32),
        ))
    return params


def transformer_forward(params, input_ids, attention_mask, token_type_ids):
    """Equivalent of Transformer.forward: BERT -> pooler_output -> dropout(eval) -> classifier."""
    B, S = input_ids.shape
    H = params["word_emb"].shape[1]
    nH = params["num_heads"]

    # --- embeddings (gather is glue; LayerNorm is a Pallas kernel, no dead residual) ---
    emb = (params["word_emb"][input_ids]
           + params["pos_emb"][jnp.arange(S)][None, :, :]
           + params["type_emb"][token_type_ids])                       # [B, S, H]
    x = embed_layernorm(emb.reshape(B * S, H),
                        params["emb_ln_g"], params["emb_ln_b"]).reshape(B, S, H)

    # attention mask passed once as [B, 1, S]; additive -10000 mask built in-kernel
    mask = attention_mask.astype(jnp.float32).reshape(B, 1, S)

    for layer in params["layers"]:
        x = attention_block(x, mask, layer["wqkv"], layer["bqkv"],
                            layer["wo"], layer["bo"],
                            layer["ln1_g"], layer["ln1_b"], num_heads=nH)
        x = ffn_block(x, layer["wi"], layer["bi"], layer["wf"], layer["bf"],
                      layer["ln2_g"], layer["ln2_b"])

    # --- pooler (CLS Linear + tanh) + dropout(eval=identity) + classifier, one fused kernel ---
    cls = x[:, 0, :]                                                   # [B, H]
    logits_padded = pool_classify(cls, params["pool_w"], params["pool_b"],
                                  params["cls_w_pad"], params["cls_b_pad"])
    return logits_padded[:, :params["num_classes"]]                    # [B, num_classes]


# ------------------------------------ main --------------------------------------

if __name__ == "__main__":
    key = jax.random.PRNGKey(0)
    k_param, k_ids = jax.random.split(key)

    B, S = 2, 8
    params = init_params(k_param, vocab=99, hidden=32, num_layers=2, num_heads=2,
                         inter=64, max_pos=16, type_vocab=2, num_classes=13)

    input_ids = jax.random.randint(k_ids, (B, S), 0, 99, dtype=jnp.int32)
    token_type_ids = jnp.zeros((B, S), jnp.int32)
    attention_mask = jnp.array([[1, 1, 1, 1, 1, 1, 1, 1],
                                [1, 1, 1, 1, 1, 0, 0, 0]], jnp.int32)

    logits = transformer_forward(params, input_ids, attention_mask, token_type_ids)
    logits = jax.block_until_ready(logits)

    assert logits.shape == (B, 13), logits.shape
    assert bool(jnp.all(jnp.isfinite(logits)))
    print("KERNEL_OK")
</pallas_src>

<mosaic_0001>
module attributes {stable_mosaic.version = 11 : i64} {
  func.func @_emb_ln_kernel(%arg0: memref<16x32xf32, #tpu.memory_space<vmem>>, %arg1: memref<1x32xf32, #tpu.memory_space<vmem>>, %arg2: memref<1x32xf32, #tpu.memory_space<vmem>>, %arg3: memref<16x32xf32, #tpu.memory_space<vmem>>) attributes {dimension_semantics = [], scalar_prefetch = 0 : i64, scratch_operands = 0 : i64, tpu.core_type = #tpu.core_type<tc>} {
    %c0 = arith.constant 0 : index
    %c0_0 = arith.constant 0 : index
    %0 = vector.load %arg0[%c0, %c0_0] : memref<16x32xf32, #tpu.memory_space<vmem>>, vector<16x32xf32>
    %c0_1 = arith.constant 0 : index
    %c0_2 = arith.constant 0 : index
    %1 = vector.load %arg1[%c0_1, %c0_2] : memref<1x32xf32, #tpu.memory_space<vmem>>, vector<1x32xf32>
    %c0_3 = arith.constant 0 : index
    %c0_4 = arith.constant 0 : index
    %2 = vector.load %arg2[%c0_3, %c0_4] : memref<1x32xf32, #tpu.memory_space<vmem>>, vector<1x32xf32>
    %cst = arith.constant dense<0.000000e+00> : vector<16xf32>
    %3 = vector.multi_reduction <add>, %0, %cst [1] : vector<16x32xf32> to vector<16xf32>
    %4 = vector.shape_cast %3 : vector<16xf32> to vector<16x1xf32>
    %cst_5 = arith.constant 3.200000e+01 : f32
    %5 = vector.broadcast %cst_5 : f32 to vector<16x1xf32>
    %6 = arith.divf %4, %5 : vector<16x1xf32>
    %7 = vector.broadcast %6 : vector<16x1xf32> to vector<16x32xf32>
    %8 = arith.subf %0, %7 : vector<16x32xf32>
    %9 = arith.mulf %8, %8 : vector<16x32xf32>
    %cst_6 = arith.constant dense<0.000000e+00> : vector<16xf32>
    %10 = vector.multi_reduction <add>, %9, %cst_6 [1] : vector<16x32xf32> to vector<16xf32>
    %11 = vector.shape_cast %10 : vector<16xf32> to vector<16x1xf32>
    %cst_7 = arith.constant 3.200000e+01 : f32
    %12 = vector.broadcast %cst_7 : f32 to vector<16x1xf32>
    %13 = arith.divf %11, %12 : vector<16x1xf32>
    %14 = vector.broadcast %6 : vector<16x1xf32> to vector<16x32xf32>
    %15 = arith.subf %0, %14 : vector<16x32xf32>
    %cst_8 = arith.constant 9.99999996E-13 : f32
    %16 = vector.broadcast %cst_8 : f32 to vector<16x1xf32>
    %17 = arith.addf %13, %16 : vector<16x1xf32>
    %18 = math.rsqrt %17 : vector<16x1xf32>
    %19 = vector.broadcast %18 : vector<16x1xf32> to vector<16x32xf32>
    %20 = arith.mulf %15, %19 : vector<16x32xf32>
    %21 = vector.broadcast %1 : vector<1x32xf32> to vector<16x32xf32>
    %22 = arith.mulf %20, %21 : vector<16x32xf32>
    %23 = vector.broadcast %2 : vector<1x32xf32> to vector<16x32xf32>
    %24 = arith.addf %22, %23 : vector<16x32xf32>
    %c0_9 = arith.constant 0 : index
    %c0_10 = arith.constant 0 : index
    %25 = vector.load %arg3[%c0_9, %c0_10] : memref<16x32xf32, #tpu.memory_space<vmem>>, vector<16x32xf32>
    tpu.vector_store %arg3[%c0_9, %c0_10], %24 {strides = array<i32>} : memref<16x32xf32, #tpu.memory_space<vmem>>, vector<16x32xf32>,
    return
  }
}

</mosaic_0001>

<llo_original>
// kernel: tpu_custom_call.1
$region0: #{tpu_custom_call.1}
  #allocation0 [shape = 'u32[]', space=smem, size = 0x4, offset = 0x4, fixed_abs, tag = 'smem constant byte address 0x4 - core index']
  #allocation1 [shape = 'u32[72,128]{1,0:T(1,128)}', space=vmem, size = 0x9000, scoped, tag = 'internal scratch']
  %s0 = inlined_call_operand.hbm [shape: f32[16,32], index: 0, kind: input, shape index: {}]
  %s1 = inlined_call_operand.hbm [shape: f32[1,32], index: 1, kind: input, shape index: {}]
  %s2 = inlined_call_operand.vmem [shape: f32[1,32], index: 2, kind: input, shape index: {}]
  %s3 = inlined_call_operand.hbm [shape: f32[16,32], index: 3, kind: output, shape index: {}]
  %s4 = sld [smem:[#allocation0]]
  $region30: #{tpu_custom_call.1} parent=0
    _
  %s6 = ssub.s32 1, %s4
  %s7 = scalar_select 0, %s6, %s4
  $region1: #{tpu_custom_call.1} parent=0
    #allocation2 [shape = 'u8[8192]{0}', space=vmem, size = 0x2000, scoped, tag = 'input window, operand 0, single buffered']
    #allocation3 [shape = 's32[1]{0}', space=sflag, size = 0x4, scoped, tag = 'scoped memory for tpu_custom_call.1']
    #allocation4 [shape = 's32[1]{0}', space=sflag, size = 0x4, scoped, tag = 'scoped memory for tpu_custom_call.1']
    #allocation5 [shape = 'u8[512]{0}', space=vmem, size = 0x400, scoped, tag = 'input window, operand 1, single buffered']
    #allocation6 [shape = 's32[1]{0}', space=sflag, size = 0x4, scoped, tag = 'scoped memory for tpu_custom_call.1']
    #allocation7 [shape = 'u8[8192]{0}', space=vmem, size = 0x2000, scoped, tag = 'output window, operand 0, single buffered']
    %8 = vsyncpa [#allocation3], 0
    %9 = vsyncpa [#allocation6], 0
    %10 = vsyncpa [#allocation4], 0
    // Predicated region
    $region2: #{tpu_custom_call.1} parent=1 // pred_check
      _
    $region3: #{tpu_custom_call.1} parent=1 // pred_check_branch
      %12 = sbr.rel (0) target = $region5
    $region4: #{tpu_custom_call.1} parent=1 // pred_region
      %14 = vsyncadd [#allocation3], 0
      %s15 = sshll.u32 %s0, 4
      %s16 = int_to_ptr.hbm [resolvable:$true] %s15
      %s17 = sshll.u32 [#allocation2], 4
      %s18 = int_to_ptr.vmem [resolvable:$true] %s17
      %23 = dma.hbm_to_vmem [thread:$0]  %s16, 256, %s18, [#allocation3], 128, 128, 8
    $region5: #{tpu_custom_call.1} parent=1 // pred_fallthru
      _
    // Predicated region
    $region6: #{tpu_custom_call.1} parent=1 // pred_check
      _
    $region7: #{tpu_custom_call.1} parent=1 // pred_check_branch
      %25 = sbr.rel (0) target = $region9
    $region8: #{tpu_custom_call.1} parent=1 // pred_region
      %27 = vsyncadd [#allocation6], 0
      %s29 = sshll.u32 %s1, 4
      %s30 = int_to_ptr.hbm [resolvable:$true] %s29
      %s31 = sshll.u32 [#allocation5], 4
      %s32 = int_to_ptr.vmem [resolvable:$true] %s31
      %34 = dma.hbm_to_vmem [thread:$0]  %s30, 16, %s32, [#allocation6]
    $region9: #{tpu_custom_call.1} parent=1 // pred_fallthru
      _
    // Predicated region
    $region10: #{tpu_custom_call.1} parent=1 // pred_check
      _
    $region11: #{tpu_custom_call.1} parent=1 // pred_check_branch
      %36 = sbr.rel (0) target = $region13
    $region12: #{tpu_custom_call.1} parent=1 // pred_region
      _
    $region13: #{tpu_custom_call.1} parent=1 // pred_fallthru
      _
    // Predicated region
    $region14: #{tpu_custom_call.1} parent=1 // pred_check
      _
    $region15: #{tpu_custom_call.1} parent=1 // pred_check_branch
      %38 = sbr.rel (0) target = $region17
    $region16: #{tpu_custom_call.1} parent=1 // pred_region
      %40 = dma.done [#allocation3], 256
    $region17: #{tpu_custom_call.1} parent=1 // pred_fallthru
      _
    // Predicated region
    $region18: #{tpu_custom_call.1} parent=1 // pred_check
      _
    $region19: #{tpu_custom_call.1} parent=1 // pred_check_branch
      %42 = sbr.rel (0) target = $region21
    $region20: #{tpu_custom_call.1} parent=1 // pred_region
      %44 = dma.done [#allocation6], 16
    $region21: #{tpu_custom_call.1} parent=1 // pred_fallthru
      _
    %v45 = vld [vmem:[#allocation2] sm:$0xff]
    %v46 = vld [vmem:[#allocation2 + $0x8] sm:$0xff]
    %v47 = vld [vmem:[#allocation5] sm:$0x1]
    %v48 = vld [vmem:[%s2] sm:$0x1]
    %vm49 = vcmask 261120
    %v50 = vsel %vm49, %v45, 0.0
    %51 = vadd.xlane.f32.xlu0 %v50
    %v52 = vpop.xlane.xlu0 %51
    %v53 = vsel %vm49, %v46, 0.0
    %54 = vadd.xlane.f32.xlu0 %v53
    %v55 = vpop.xlane.xlu0 %54
    %v56 = vrcp.pop 32.0
    %v57 = vmul.f32 32.0, %v56
    %v58 = vsub.f32 1.0, %v57
    %v59 = vmul.f32 %v56, %v58
    %v60 = vadd.f32 %v56, %v59
    %vm61 = vweird.f32 %v56
    %v62 = vsel %vm61, %v56, %v60
    %v63 = vmul.f32 %v52, %v62
    %v64 = vmul.f32 %v55, %v62
    %v65 = vsub.f32 %v45, %v63
    %v66 = vsub.f32 %v46, %v64
    %v67 = vmul.f32 %v65, %v65
    %v68 = vmul.f32 %v66, %v66
    %v69 = vsel %vm49, %v67, 0.0
    %70 = vadd.xlane.f32.xlu0 %v69
    %v71 = vpop.xlane.xlu0 %70
    %v72 = vsel %vm49, %v68, 0.0
    %73 = vadd.xlane.f32.xlu0 %v72
    %v74 = vpop.xlane.xlu0 %73
    %v75 = vmul.f32 %v71, %v62
    %v76 = vmul.f32 %v74, %v62
    %v77 = vadd.f32 %v75, 1e-12
    %v78 = vadd.f32 %v76, 1e-12
    %v79 = vrsqrt.pop %v77
    %v80 = vmul.f32 %v79, %v77
    %v81 = vmul.f32 %v80, %v79
    %v82 = vmul.f32 0.5, %v81
    %v83 = vsub.f32 1.5, %v82
    %v84 = vmul.f32 %v79, %v83
    %vm85 = vweird.f32 %v77
    %vm86 = vweird.f32 %v79
    %vm87 = vmor %vm85, %vm86
    %v88 = vsel %vm87, %v79, %v84
    %v89 = vrsqrt.pop %v78
    %v90 = vmul.f32 %v89, %v78
    %v91 = vmul.f32 %v90, %v89
    %v92 = vmul.f32 0.5, %v91
    %v93 = vsub.f32 1.5, %v92
    %v94 = vmul.f32 %v89, %v93
    %vm95 = vweird.f32 %v78
    %vm96 = vweird.f32 %v89
    %vm97 = vmor %vm95, %vm96
    %v98 = vsel %vm97, %v89, %v94
    %v99 = vmul.f32 %v65, %v88
    %v100 = vmul.f32 %v66, %v98
    %v102 = vperm.slane %v47, 0
    %v104 = vmul.f32 %v99, %v102
    %v105 = vmul.f32 %v100, %v102
    %v107 = vperm.slane %v48, 0
    %v109 = vadd.f32 %v104, %v107
    %v110 = vadd.f32 %v105, %v107
    %111 = vst.msk [vmem:[#allocation7] sm:$0xff] %vm49, %v109
    %112 = vst.msk [vmem:[#allocation7 + $0x8] sm:$0xff] %vm49, %v110
    // Predicated region
    $region22: #{tpu_custom_call.1} parent=1 // pred_check
      _
    $region23: #{tpu_custom_call.1} parent=1 // pred_check_branch
      %114 = sbr.rel (0) target = $region25
    $region24: #{tpu_custom_call.1} parent=1 // pred_region
      %116 = vsyncadd [#allocation4], 0
      %s117 = sshll.u32 [#allocation7], 4
      %s118 = int_to_ptr.vmem [resolvable:$true] %s117
      %s119 = sshll.u32 %s3, 4
      %s120 = int_to_ptr.hbm [resolvable:$true] %s119
      %125 = dma.vmem_to_hbm [thread:$0]  %s118, 256, %s120, [#allocation4], 128, 128, 8
    $region25: #{tpu_custom_call.1} parent=1 // pred_fallthru
      _
    // Predicated region
    $region26: #{tpu_custom_call.1} parent=1 // pred_check
      _
    $region27: #{tpu_custom_call.1} parent=1 // pred_check_branch
      %127 = sbr.rel (0) target = $region29
    $region28: #{tpu_custom_call.1} parent=1 // pred_region
      %129 = dma.done [#allocation4], 256
    $region29: #{tpu_custom_call.1} parent=1 // pred_fallthru
      _
    %130 = vsyncpa [#allocation3], 1
    %131 = vsyncpa [#allocation6], 1
    %132 = vsyncpa [#allocation4], 1

</llo_original>
